<compile_context>
chip_gen: v6e
topology: v6e:2x2x1
jax: 0.10.0
libtpu: 0.0.40
codegen_flags: <defaults>
</compile_context>

<pallas_src>
import math

import jax
import jax.numpy as jnp
from jax.experimental import pallas as pl
from jax.experimental.pallas import tpu as pltpu


# ----------------------------------------------------------------------------------------------
# Kernels
# ----------------------------------------------------------------------------------------------

def mlp_kernel_bm(x_ref, w1_ref, b1_ref, w2_ref, b2_ref, w3_ref, b3_ref, o_ref):
    """Batch-major: x_ref (tile, F); w (in, out); b (1, out); o_ref (tile, O)."""
    h = jnp.dot(x_ref[...], w1_ref[...], preferred_element_type=jnp.float32)
    h = jnp.maximum(h + b1_ref[...], 0.0)
    h = jnp.dot(h, w2_ref[...], preferred_element_type=jnp.float32)
    h = jnp.maximum(h + b2_ref[...], 0.0)
    out = jnp.dot(h, w3_ref[...], preferred_element_type=jnp.float32) + b3_ref[...]
    o_ref[...] = out.astype(o_ref.dtype)


def mlp_kernel_fm(x_ref, w1_ref, b1_ref, w2_ref, b2_ref, w3_ref, b3_ref, o_ref):
    """Feature-major: x_ref (F, tile); w (out, in); b (out, 1); o_ref (O, tile).
    Batch maps to lanes -> input/output fully lane-dense, full-width stores."""
    h = jnp.dot(w1_ref[...], x_ref[...], preferred_element_type=jnp.float32)
    h = jnp.maximum(h + b1_ref[...], 0.0)
    h = jnp.dot(w2_ref[...], h, preferred_element_type=jnp.float32)
    h = jnp.maximum(h + b2_ref[...], 0.0)
    out = jnp.dot(w3_ref[...], h, preferred_element_type=jnp.float32) + b3_ref[...]
    o_ref[...] = out.astype(o_ref.dtype)


# ----------------------------------------------------------------------------------------------
# Wrappers
# ----------------------------------------------------------------------------------------------

def _choose_tile(batch, requested, align):
    """Biggest batch tile up to `requested`, aligned to `align`.
    No half-cap: on single-TC v5e/v6e extra grid steps only add per-step overhead; on v7x a
    >=2-steps-per-core split appears naturally once batch >> requested (grid = cdiv >= 4)."""
    if batch <= requested:
        return batch                              # full-extent block: legal for any size
    return max(align, (requested // align) * align)


def _cost_estimate(batch, params, itemsize, out_features):
    flops = 2 * batch * sum(int(w.shape[0]) * int(w.shape[1]) for (w, _) in params)
    param_bytes = sum(int(a.size) * a.dtype.itemsize for p in params for a in p)
    in_features = int(params[0][0].size) // int(params[0][1].size) * int(params[0][1].size)
    in_features = int(params[0][0].shape[0]) if params[0][0].shape[0] != params[0][0].shape[1] else int(params[0][0].shape[0])
    bytes_accessed = batch * (int(params[0][0].shape[0]) + out_features) * itemsize + param_bytes
    return pl.CostEstimate(flops=flops, transcendentals=0, bytes_accessed=int(bytes_accessed))


def feedforward_nn(x, params, *, batch_tile=1024):
    """Module-contract layout: x (B, F) -> (B, O). f32 end-to-end, weights resident in VMEM.
    The (tile, 8) output is inherently lane-padded by the module's (batch, targets) contract;
    use feedforward_nn_feature_major for the lane-dense layout."""
    (w1, b1), (w2, b2), (w3, b3) = params
    B, F = x.shape
    O = w3.shape[1]

    tile = _choose_tile(B, batch_tile, 8)
    grid = (pl.cdiv(B, tile),)
    ce = _cost_estimate(B, params, x.dtype.itemsize, O)

    return pl.pallas_call(
        mlp_kernel_bm,
        out_shape=jax.ShapeDtypeStruct((B, O), x.dtype),
        grid=grid,
        in_specs=[
            pl.BlockSpec((tile, F), lambda i: (i, 0)),     # x tile over batch (f32)
            pl.BlockSpec(w1.shape, lambda i: (0, 0)),      # weights/biases: constant index_map
            pl.BlockSpec(b1.shape, lambda i: (0, 0)),      #   -> resident in VMEM across grid
            pl.BlockSpec(w2.shape, lambda i: (0, 0)),
            pl.BlockSpec(b2.shape, lambda i: (0, 0)),
            pl.BlockSpec(w3.shape, lambda i: (0, 0)),
            pl.BlockSpec(b3.shape, lambda i: (0, 0)),
        ],
        out_specs=pl.BlockSpec((tile, O), lambda i: (i, 0)),
        compiler_params=pltpu.CompilerParams(dimension_semantics=("parallel",)),
        cost_estimate=ce,
    )(x, w1, b1, w2, b2, w3, b3)


def params_to_feature_major(params):
    """One-time parameter prep for the feature-major kernel:
    weight (in, out) -> (out, in), bias (1, out) -> (out, 1). Do this once, not per call."""
    return [(w.T, b.T) for (w, b) in params]


def feedforward_nn_feature_major(x_fm, params_fm, *, batch_tile=1024):
    """Lane-dense layout: x_fm (F, B) -> (O, B). Batch on lanes => dense (16, B) reads,
    dense (8, B) full-width stores, MXU N = batch tile. Preferred when the caller can
    adopt the (features, batch) layout end-to-end."""
    (w1, b1), (w2, b2), (w3, b3) = params_fm
    F, B = x_fm.shape
    O = w3.shape[0]

    tile = _choose_tile(B, batch_tile, 128)        # lane-dim tiles must be multiples of 128
    grid = (pl.cdiv(B, tile),)
    flops = 2 * B * sum(int(w.shape[0]) * int(w.shape[1]) for (w, _) in params_fm)
    param_bytes = sum(int(a.size) * a.dtype.itemsize for p in params_fm for a in p)
    ce = pl.CostEstimate(flops=flops, transcendentals=0,
                         bytes_accessed=int(B * (F + O) * x_fm.dtype.itemsize + param_bytes))

    return pl.pallas_call(
        mlp_kernel_fm,
        out_shape=jax.ShapeDtypeStruct((O, B), x_fm.dtype),
        grid=grid,
        in_specs=[
            pl.BlockSpec((F, tile), lambda i: (0, i)),     # x tile over batch (lanes)
            pl.BlockSpec(w1.shape, lambda i: (0, 0)),
            pl.BlockSpec(b1.shape, lambda i: (0, 0)),
            pl.BlockSpec(w2.shape, lambda i: (0, 0)),
            pl.BlockSpec(b2.shape, lambda i: (0, 0)),
            pl.BlockSpec(w3.shape, lambda i: (0, 0)),
            pl.BlockSpec(b3.shape, lambda i: (0, 0)),
        ],
        out_specs=pl.BlockSpec((O, tile), lambda i: (0, i)),
        compiler_params=pltpu.CompilerParams(dimension_semantics=("parallel",)),
        cost_estimate=ce,
    )(x_fm, w1, b1, w2, b2, w3, b3)


# ----------------------------------------------------------------------------------------------
# Init / reference
# ----------------------------------------------------------------------------------------------

def init_linear(key, fan_in, fan_out, dtype=jnp.float32):
    """PyTorch nn.Linear default init: U(-1/sqrt(fan_in), 1/sqrt(fan_in)) for weight and bias.
    Weight returned pre-transposed to (fan_in, fan_out); bias as a (1, fan_out) row."""
    kw, kb = jax.random.split(key)
    bound = 1.0 / math.sqrt(fan_in)
    w = jax.random.uniform(kw, (fan_in, fan_out), dtype, minval=-bound, maxval=bound)
    b = jax.random.uniform(kb, (1, fan_out), dtype, minval=-bound, maxval=bound)
    return w, b


def reference_forward_f32(x, params):
    """Pure f32 reference (HIGHEST precision dots) matching the PyTorch module math."""
    (w1, b1), (w2, b2), (w3, b3) = params
    hi = jax.lax.Precision.HIGHEST
    h = jnp.maximum(jnp.dot(x, w1, precision=hi) + b1, 0.0)
    h = jnp.maximum(jnp.dot(h, w2, precision=hi) + b2, 0.0)
    return jnp.dot(h, w3, precision=hi) + b3


# ----------------------------------------------------------------------------------------------
# Demo / correctness check
# ----------------------------------------------------------------------------------------------

if __name__ == "__main__":
    # shape = {'features': (16,), 'targets': (8,)}, layers = [32, 32, 64, 64]
    feature_size = 16
    targets_size = 8
    batch = 256  # small demo batch -> a single full-extent block, grid of 1

    key = jax.random.PRNGKey(0)
    kx, k1, k2, k3 = jax.random.split(key, 4)

    x = jax.random.normal(kx, (batch, feature_size), jnp.float32)

    params = [
        init_linear(k1, feature_size, 32),   # Linear(features=16 -> layers[0]=32)
        init_linear(k2, 32, 64),             # Linear(layers[1]=32 -> layers[2]=64)
        init_linear(k3, 64, targets_size),   # Linear(layers[-1]=64 -> targets=8)
    ]
    # TODO(synk): dropout / layer_norm / batch_norm branches of the module are off by default and
    # therefore not fused here; adding them would require row-coupled ops in the kernel.

    ref = reference_forward_f32(x, params)

    # Batch-major (module-contract) kernel.
    out = jax.block_until_ready(feedforward_nn(x, params))
    assert out.shape == (batch, targets_size)
    assert jnp.allclose(out, ref, atol=2e-2, rtol=2e-2), "batch-major kernel mismatch vs f32 reference"

    # Feature-major (lane-dense) kernel.
    params_fm = params_to_feature_major(params)
    out_fm = jax.block_until_ready(feedforward_nn_feature_major(x.T, params_fm))
    assert out_fm.shape == (targets_size, batch)
    assert jnp.allclose(out_fm.T, ref, atol=2e-2, rtol=2e-2), "feature-major kernel mismatch vs f32 reference"

    print("KERNEL_OK")
</pallas_src>

<mosaic_0001>
module attributes {stable_mosaic.version = 11 : i64} {
  func.func @mlp_kernel_bm(%arg0: i32, %arg1: memref<256x16xf32, #tpu.memory_space<vmem>>, %arg2: memref<16x32xf32, #tpu.memory_space<vmem>>, %arg3: memref<1x32xf32, #tpu.memory_space<vmem>>, %arg4: memref<32x64xf32, #tpu.memory_space<vmem>>, %arg5: memref<1x64xf32, #tpu.memory_space<vmem>>, %arg6: memref<64x8xf32, #tpu.memory_space<vmem>>, %arg7: memref<1x8xf32, #tpu.memory_space<vmem>>, %arg8: memref<256x8xf32, #tpu.memory_space<vmem>>) attributes {dimension_semantics = [#tpu.dimension_semantics<parallel>], iteration_bounds = array<i64: 1>, scalar_prefetch = 0 : i64, scratch_operands = 0 : i64, tpu.core_type = #tpu.core_type<tc>, window_params = [{transform_indices = @transform_0, window_bounds = array<i64: 256, 16>}, {pipeline_mode = #tpu.pipeline_mode<synchronous>, transform_indices = @transform_1, window_bounds = array<i64: 16, 32>}, {pipeline_mode = #tpu.pipeline_mode<synchronous>, transform_indices = @transform_2, window_bounds = array<i64: 1, 32>}, {pipeline_mode = #tpu.pipeline_mode<synchronous>, transform_indices = @transform_3, window_bounds = array<i64: 32, 64>}, {pipeline_mode = #tpu.pipeline_mode<synchronous>, transform_indices = @transform_4, window_bounds = array<i64: 1, 64>}, {pipeline_mode = #tpu.pipeline_mode<synchronous>, transform_indices = @transform_5, window_bounds = array<i64: 64, 8>}, {pipeline_mode = #tpu.pipeline_mode<synchronous>, transform_indices = @transform_6, window_bounds = array<i64: 1, 8>}, {transform_indices = @transform_7, window_bounds = array<i64: 256, 8>}]} {
    %c0 = arith.constant 0 : index
    %c0_0 = arith.constant 0 : index
    %0 = vector.load %arg1[%c0, %c0_0] : memref<256x16xf32, #tpu.memory_space<vmem>>, vector<256x16xf32>
    %c0_1 = arith.constant 0 : index
    %c0_2 = arith.constant 0 : index
    %1 = vector.load %arg2[%c0_1, %c0_2] : memref<16x32xf32, #tpu.memory_space<vmem>>, vector<16x32xf32>
    %cst = arith.constant dense<0.000000e+00> : vector<256x32xf32>
    %2 = tpu.matmul %0, %1, %cst {dimension_numbers = #tpu.dot_dimension_numbers<[1], [0], [0], [1], [0, 0, 1, 1], [], []>} : vector<256x16xf32>, vector<16x32xf32>, vector<256x32xf32> -> vector<256x32xf32>
    %c0_3 = arith.constant 0 : index
    %c0_4 = arith.constant 0 : index
    %3 = vector.load %arg3[%c0_3, %c0_4] : memref<1x32xf32, #tpu.memory_space<vmem>>, vector<1x32xf32>
    %4 = vector.broadcast %3 : vector<1x32xf32> to vector<256x32xf32>
    %5 = arith.addf %2, %4 : vector<256x32xf32>
    %cst_5 = arith.constant 0.000000e+00 : f32
    %6 = vector.broadcast %cst_5 : f32 to vector<256x32xf32>
    %7 = arith.maximumf %5, %6 : vector<256x32xf32>
    %c0_6 = arith.constant 0 : index
    %c0_7 = arith.constant 0 : index
    %8 = vector.load %arg4[%c0_6, %c0_7] : memref<32x64xf32, #tpu.memory_space<vmem>>, vector<32x64xf32>
    %cst_8 = arith.constant dense<0.000000e+00> : vector<256x64xf32>
    %9 = tpu.matmul %7, %8, %cst_8 {dimension_numbers = #tpu.dot_dimension_numbers<[1], [0], [0], [1], [0, 0, 1, 1], [], []>} : vector<256x32xf32>, vector<32x64xf32>, vector<256x64xf32> -> vector<256x64xf32>
    %c0_9 = arith.constant 0 : index
    %c0_10 = arith.constant 0 : index
    %10 = vector.load %arg5[%c0_9, %c0_10] : memref<1x64xf32, #tpu.memory_space<vmem>>, vector<1x64xf32>
    %11 = vector.broadcast %10 : vector<1x64xf32> to vector<256x64xf32>
    %12 = arith.addf %9, %11 : vector<256x64xf32>
    %cst_11 = arith.constant 0.000000e+00 : f32
    %13 = vector.broadcast %cst_11 : f32 to vector<256x64xf32>
    %14 = arith.maximumf %12, %13 : vector<256x64xf32>
    %c0_12 = arith.constant 0 : index
    %c0_13 = arith.constant 0 : index
    %15 = vector.load %arg6[%c0_12, %c0_13] : memref<64x8xf32, #tpu.memory_space<vmem>>, vector<64x8xf32>
    %cst_14 = arith.constant dense<0.000000e+00> : vector<256x8xf32>
    %16 = tpu.matmul %14, %15, %cst_14 {dimension_numbers = #tpu.dot_dimension_numbers<[1], [0], [0], [1], [0, 0, 1, 1], [], []>} : vector<256x64xf32>, vector<64x8xf32>, vector<256x8xf32> -> vector<256x8xf32>
    %c0_15 = arith.constant 0 : index
    %c0_16 = arith.constant 0 : index
    %17 = vector.load %arg7[%c0_15, %c0_16] : memref<1x8xf32, #tpu.memory_space<vmem>>, vector<1x8xf32>
    %18 = vector.broadcast %17 : vector<1x8xf32> to vector<256x8xf32>
    %19 = arith.addf %16, %18 : vector<256x8xf32>
    %c0_17 = arith.constant 0 : index
    %c0_18 = arith.constant 0 : index
    %20 = vector.load %arg8[%c0_17, %c0_18] : memref<256x8xf32, #tpu.memory_space<vmem>>, vector<256x8xf32>
    tpu.vector_store %arg8[%c0_17, %c0_18], %19 {strides = array<i32>} : memref<256x8xf32, #tpu.memory_space<vmem>>, vector<256x8xf32>,
    return
  }
  func.func @transform_0(%arg0: i32) -> (i32, i32) {
    %c0_i32 = arith.constant 0 : i32
    %c0_i32_0 = arith.constant 0 : i32
    return %arg0, %c0_i32 : i32, i32
  }
  func.func @transform_1(%arg0: i32) -> (i32, i32) {
    %c0_i32 = arith.constant 0 : i32
    %c0_i32_0 = arith.constant 0 : i32
    %c0_i32_1 = arith.constant 0 : i32
    return %c0_i32, %c0_i32_0 : i32, i32
  }
  func.func @transform_2(%arg0: i32) -> (i32, i32) {
    %c0_i32 = arith.constant 0 : i32
    %c0_i32_0 = arith.constant 0 : i32
    %c0_i32_1 = arith.constant 0 : i32
    return %c0_i32, %c0_i32_0 : i32, i32
  }
  func.func @transform_3(%arg0: i32) -> (i32, i32) {
    %c0_i32 = arith.constant 0 : i32
    %c0_i32_0 = arith.constant 0 : i32
    %c0_i32_1 = arith.constant 0 : i32
    return %c0_i32, %c0_i32_0 : i32, i32
  }
  func.func @transform_4(%arg0: i32) -> (i32, i32) {
    %c0_i32 = arith.constant 0 : i32
    %c0_i32_0 = arith.constant 0 : i32
    %c0_i32_1 = arith.constant 0 : i32
    return %c0_i32, %c0_i32_0 : i32, i32
  }
  func.func @transform_5(%arg0: i32) -> (i32, i32) {
    %c0_i32 = arith.constant 0 : i32
    %c0_i32_0 = arith.constant 0 : i32
    %c0_i32_1 = arith.constant 0 : i32
    return %c0_i32, %c0_i32_0 : i32, i32
  }
  func.func @transform_6(%arg0: i32) -> (i32, i32) {
    %c0_i32 = arith.constant 0 : i32
    %c0_i32_0 = arith.constant 0 : i32
    %c0_i32_1 = arith.constant 0 : i32
    return %c0_i32, %c0_i32_0 : i32, i32
  }
  func.func @transform_7(%arg0: i32) -> (i32, i32) {
    %c0_i32 = arith.constant 0 : i32
    %c0_i32_0 = arith.constant 0 : i32
    return %arg0, %c0_i32 : i32, i32
  }
}

</mosaic_0001>

<llo_original>
// kernel: tpu_custom_call.1
$region0: #{tpu_custom_call.1}
  #allocation0 [shape = 'u32[]', space=smem, size = 0x4, offset = 0x4, fixed_abs, tag = 'smem constant byte address 0x4 - core index']
  #allocation1 [shape = 'u32[144,128]{1,0:T(1,128)}', space=vmem, size = 0x12000, scoped, tag = 'internal scratch']
  %s0 = inlined_call_operand.vmem [shape: f32[256,16], index: 0, kind: input, shape index: {}]
  %s1 = inlined_call_operand.vmem [shape: f32[16,32], index: 1, kind: input, shape index: {}]
  %s2 = inlined_call_operand.vmem [shape: f32[1,32], index: 2, kind: input, shape index: {}]
  %s3 = inlined_call_operand.vmem [shape: f32[32,64], index: 3, kind: input, shape index: {}]
  %s4 = inlined_call_operand.vmem [shape: f32[1,64], index: 4, kind: input, shape index: {}]
  %s5 = inlined_call_operand.vmem [shape: f32[64,8], index: 5, kind: input, shape index: {}]
  %s6 = inlined_call_operand.vmem [shape: f32[1,8], index: 6, kind: input, shape index: {}]
  %s7 = inlined_call_operand.vmem [shape: f32[256,8], index: 7, kind: output, shape index: {}]
  %s8 = sld [smem:[#allocation0]]
  $region38: #{tpu_custom_call.1} parent=0
    _
  %s10 = ssub.s32 1, %s8
  %s11 = scalar_select 0, %s10, %s8
  // Predicated region
  $region2: #{tpu_custom_call.1} parent=0 // pred_check
    _
  $region3: #{tpu_custom_call.1} parent=0 // pred_check_branch
    %13 = sbr.rel (0) target = $region5
  $region4: #{tpu_custom_call.1} parent=0 // pred_region
    _
  $region5: #{tpu_custom_call.1} parent=0 // pred_fallthru
    _
  // Predicated region
  $region6: #{tpu_custom_call.1} parent=0 // pred_check
    _
  $region7: #{tpu_custom_call.1} parent=0 // pred_check_branch
    %15 = sbr.rel (0) target = $region9
  $region8: #{tpu_custom_call.1} parent=0 // pred_region
    _
  $region9: #{tpu_custom_call.1} parent=0 // pred_fallthru
    _
  // Predicated region
  $region10: #{tpu_custom_call.1} parent=0 // pred_check
    _
  $region11: #{tpu_custom_call.1} parent=0 // pred_check_branch
    %17 = sbr.rel (0) target = $region13
  $region12: #{tpu_custom_call.1} parent=0 // pred_region
    _
  $region13: #{tpu_custom_call.1} parent=0 // pred_fallthru
    _
  // Predicated region
  $region14: #{tpu_custom_call.1} parent=0 // pred_check
    _
  $region15: #{tpu_custom_call.1} parent=0 // pred_check_branch
    %19 = sbr.rel (0) target = $region17
  $region16: #{tpu_custom_call.1} parent=0 // pred_region
    _
  $region17: #{tpu_custom_call.1} parent=0 // pred_fallthru
    _
  // Predicated region
  $region18: #{tpu_custom_call.1} parent=0 // pred_check
    _
  $region19: #{tpu_custom_call.1} parent=0 // pred_check_branch
    %21 = sbr.rel (0) target = $region21
  $region20: #{tpu_custom_call.1} parent=0 // pred_region
    _
  $region21: #{tpu_custom_call.1} parent=0 // pred_fallthru
    _
  // Predicated region
  $region22: #{tpu_custom_call.1} parent=0 // pred_check
    _
  $region23: #{tpu_custom_call.1} parent=0 // pred_check_branch
    %23 = sbr.rel (0) target = $region25
  $region24: #{tpu_custom_call.1} parent=0 // pred_region
    _
  $region25: #{tpu_custom_call.1} parent=0 // pred_fallthru
    _
  // Predicated region
  $region26: #{tpu_custom_call.1} parent=0 // pred_check
    _
  $region27: #{tpu_custom_call.1} parent=0 // pred_check_branch
    %25 = sbr.rel (0) target = $region29
  $region28: #{tpu_custom_call.1} parent=0 // pred_region
    _
  $region29: #{tpu_custom_call.1} parent=0 // pred_fallthru
    _
  %v26 = vld [vmem:[%s0] sm:$0xff]
  %v27 = vld [vmem:[%s0 + $0x8] sm:$0xff]
  %v28 = vld [vmem:[%s0 + $0x10] sm:$0xff]
  %v29 = vld [vmem:[%s0 + $0x18] sm:$0xff]
  %v30 = vld [vmem:[%s0 + $0x20] sm:$0xff]
  %v31 = vld [vmem:[%s0 + $0x28] sm:$0xff]
  %v32 = vld [vmem:[%s0 + $0x30] sm:$0xff]
  %v33 = vld [vmem:[%s0 + $0x38] sm:$0xff]
  %v34 = vld [vmem:[%s0 + $0x40] sm:$0xff]
  %v35 = vld [vmem:[%s0 + $0x48] sm:$0xff]
  %v36 = vld [vmem:[%s0 + $0x50] sm:$0xff]
  %v37 = vld [vmem:[%s0 + $0x58] sm:$0xff]
  %v38 = vld [vmem:[%s0 + $0x60] sm:$0xff]
  %v39 = vld [vmem:[%s0 + $0x68] sm:$0xff]
  %v40 = vld [vmem:[%s0 + $0x70] sm:$0xff]
  %v41 = vld [vmem:[%s0 + $0x78] sm:$0xff]
  %v42 = vld [vmem:[%s0 + $0x80] sm:$0xff]
  %v43 = vld [vmem:[%s0 + $0x88] sm:$0xff]
  %v44 = vld [vmem:[%s0 + $0x90] sm:$0xff]
  %v45 = vld [vmem:[%s0 + $0x98] sm:$0xff]
  %v46 = vld [vmem:[%s0 + $0xa0] sm:$0xff]
  %v47 = vld [vmem:[%s0 + $0xa8] sm:$0xff]
  %v48 = vld [vmem:[%s0 + $0xb0] sm:$0xff]
  %v49 = vld [vmem:[%s0 + $0xb8] sm:$0xff]
  %v50 = vld [vmem:[%s0 + $0xc0] sm:$0xff]
  %v51 = vld [vmem:[%s0 + $0xc8] sm:$0xff]
  %v52 = vld [vmem:[%s0 + $0xd0] sm:$0xff]
  %v53 = vld [vmem:[%s0 + $0xd8] sm:$0xff]
  %v54 = vld [vmem:[%s0 + $0xe0] sm:$0xff]
  %v55 = vld [vmem:[%s0 + $0xe8] sm:$0xff]
  %v56 = vld [vmem:[%s0 + $0xf0] sm:$0xff]
  %v57 = vld [vmem:[%s0 + $0xf8] sm:$0xff]
  %v58 = vld [vmem:[%s1] sm:$0xff]
  %v59 = vld [vmem:[%s1 + $0x8] sm:$0xff]
  %v60 = vld [vmem:[%s2] sm:$0x1]
  %v62 = vlaneseq
  %v63 = vshrl.u32 %v62, 7
  %v64 = vsub.s32 0, %v63
  %v65 = vrot.slane %v60, %v64
  %vm67 = vcmask 130048
  %v69 = vsel %vm67, %v26, 0
  %v72 = vsel %vm67, %v27, 0
  %v75 = vsel %vm67, %v28, 0
  %v78 = vsel %vm67, %v29, 0
  %v81 = vsel %vm67, %v30, 0
  %v84 = vsel %vm67, %v31, 0
  %v87 = vsel %vm67, %v32, 0
  %v90 = vsel %vm67, %v33, 0
  %v93 = vsel %vm67, %v34, 0
  %v96 = vsel %vm67, %v35, 0
  %v99 = vsel %vm67, %v36, 0
  %v102 = vsel %vm67, %v37, 0
  %v105 = vsel %vm67, %v38, 0
  %v108 = vsel %vm67, %v39, 0
  %v111 = vsel %vm67, %v40, 0
  %v114 = vsel %vm67, %v41, 0
  %v117 = vsel %vm67, %v42, 0
  %v120 = vsel %vm67, %v43, 0
  %v123 = vsel %vm67, %v44, 0
  %v126 = vsel %vm67, %v45, 0
  %v129 = vsel %vm67, %v46, 0
  %v132 = vsel %vm67, %v47, 0
  %v135 = vsel %vm67, %v48, 0
  %v138 = vsel %vm67, %v49, 0
  %v141 = vsel %vm67, %v50, 0
  %v144 = vsel %vm67, %v51, 0
  %v147 = vsel %vm67, %v52, 0
  %v150 = vsel %vm67, %v53, 0
  %v153 = vsel %vm67, %v54, 0
  %v156 = vsel %vm67, %v55, 0
  %v159 = vsel %vm67, %v56, 0
  %v162 = vsel %vm67, %v57, 0
  %164 = vmatprep.subr.mxu0 0.0
  %165 = vmatpush1.msra.mxu0 0.0
  %166 = vmatprep.subr.mxu0 0.0
  %167 = vmatpush1.msra.mxu0 0.0
  %168 = vmatprep.subr.mxu0 0.0
  %169 = vmatpush1.msra.mxu0 0.0
  %170 = vmatprep.subr.mxu0 0.0
  %171 = vmatpush1.msra.mxu0 0.0
  %172 = vmatprep.subr.mxu0 0.0
  %173 = vmatpush1.msra.mxu0 0.0
  %174 = vmatprep.subr.mxu0 0.0
  %175 = vmatpush1.msra.mxu0 0.0
  %176 = vmatprep.subr.mxu0 0.0
  %177 = vmatpush1.msra.mxu0 0.0
  %178 = vmatprep.subr.mxu0 0.0
  %179 = vmatpush1.msra.mxu0 0.0
  %180 = vmatprep.subr.mxu0 0.0
  %181 = vmatpush1.msra.mxu0 0.0
  %182 = vmatprep.subr.mxu0 0.0
  %183 = vmatpush1.msra.mxu0 0.0
  %184 = vmatprep.subr.mxu0 0.0
  %185 = vmatpush1.msra.mxu0 0.0
  %186 = vmatprep.subr.mxu0 0.0
  %187 = vmatpush1.msra.mxu0 0.0
  %188 = vmatprep.subr.mxu0 0.0
  %189 = vmatpush1.msra.mxu0 0.0
  %190 = vmatprep.subr.mxu0 0.0
  %191 = vmatpush1.msra.mxu0 0.0
  %192 = vmatprep.subr.mxu0 0.0
  %193 = vmatpush1.msra.mxu0 %v59
  %194 = vmatprep.subr.mxu0 0.0
  %195 = vmatpush1.msra.mxu0 %v58
  %196 = vmatprep.subr.mxu0 0.0
  %197 = vmatpush2.msra.mxu0 0.0
  %198 = vmatprep.subr.mxu0 0.0
  %199 = vmatpush2.msra.mxu0 0.0
  %200 = vmatprep.subr.mxu0 0.0
  %201 = vmatpush2.msra.mxu0 0.0
  %202 = vmatprep.subr.mxu0 0.0
  %203 = vmatpush2.msra.mxu0 0.0
  %204 = vmatprep.subr.mxu0 0.0
  %205 = vmatpush2.msra.mxu0 0.0
  %206 = vmatprep.subr.mxu0 0.0
  %207 = vmatpush2.msra.mxu0 0.0
  %208 = vmatprep.subr.mxu0 0.0
  %209 = vmatpush2.msra.mxu0 0.0
  %210 = vmatprep.subr.mxu0 0.0
  %211 = vmatpush2.msra.mxu0 0.0
  %212 = vmatprep.subr.mxu0 0.0
  %213 = vmatpush2.msra.mxu0 0.0
  %214 = vmatprep.subr.mxu0 0.0
  %215 = vmatpush2.msra.mxu0 0.0
  %216 = vmatprep.subr.mxu0 0.0
  %217 = vmatpush2.msra.mxu0 0.0
  %218 = vmatprep.subr.mxu0 0.0
  %219 = vmatpush2.msra.mxu0 0.0
  %220 = vmatprep.subr.mxu0 0.0
  %221 = vmatpush2.msra.mxu0 0.0
  %222 = vmatprep.subr.mxu0 0.0
  %223 = vmatpush2.msra.mxu0 0.0
  %224 = vmatprep.subr.mxu0 0.0
  %225 = vmatpush2.msra.mxu0 0.0
  %226 = vmatprep.subr.mxu0 0.0
  %227 = vmatpush2.msra.mxu0 0.0
  %228 = vmatprep.mubr.f32.mxu0 0.0
  %229 = vmatmul.mubr.f32.gmra.mxu0 %v69
  %v230 = vpop.f32.mrf.mxu0
  %v231 = vadd.f32 %v65, %v230
  %v232 = vpop.f32.mrf.mxu0
  %233 = vmatprep.mubr.f32.mxu0 0.0
  %234 = vmatmul.mubr.f32.gmra.mxu0 %v72
  %v235 = vpop.f32.mrf.mxu0
  %v236 = vadd.f32 %v65, %v235
  %v237 = vpop.f32.mrf.mxu0
  %238 = vmatprep.mubr.f32.mxu0 0.0
  %239 = vmatmul.mubr.f32.gmra.mxu0 %v75
  %v240 = vpop.f32.mrf.mxu0
  %v241 = vadd.f32 %v65, %v240
  %v242 = vpop.f32.mrf.mxu0
  %243 = vmatprep.mubr.f32.mxu0 0.0
  %244 = vmatmul.mubr.f32.gmra.mxu0 %v78
  %v245 = vpop.f32.mrf.mxu0
  %v246 = vadd.f32 %v65, %v245
  %v247 = vpop.f32.mrf.mxu0
  %248 = vmatprep.mubr.f32.mxu0 0.0
  %249 = vmatmul.mubr.f32.gmra.mxu0 %v81
  %v250 = vpop.f32.mrf.mxu0
  %v251 = vadd.f32 %v65, %v250
  %v252 = vpop.f32.mrf.mxu0
  %253 = vmatprep.mubr.f32.mxu0 0.0
  %254 = vmatmul.mubr.f32.gmra.mxu0 %v84
  %v255 = vpop.f32.mrf.mxu0
  %v256 = vadd.f32 %v65, %v255
  %v257 = vpop.f32.mrf.mxu0
  %258 = vmatprep.mubr.f32.mxu0 0.0
  %259 = vmatmul.mubr.f32.gmra.mxu0 %v87
  %v260 = vpop.f32.mrf.mxu0
  %v261 = vadd.f32 %v65, %v260
  %v262 = vpop.f32.mrf.mxu0
  %263 = vmatprep.mubr.f32.mxu0 0.0
  %264 = vmatmul.mubr.f32.gmra.mxu0 %v90
  %v265 = vpop.f32.mrf.mxu0
  %v266 = vadd.f32 %v65, %v265
  %v267 = vpop.f32.mrf.mxu0
  %268 = vmatprep.mubr.f32.mxu0 0.0
  %269 = vmatmul.mubr.f32.gmra.mxu0 %v93
  %v270 = vpop.f32.mrf.mxu0
  %v271 = vadd.f32 %v65, %v270
  %v272 = vpop.f32.mrf.mxu0
  %273 = vmatprep.mubr.f32.mxu0 0.0
  %274 = vmatmul.mubr.f32.gmra.mxu0 %v96
  %v275 = vpop.f32.mrf.mxu0
  %v276 = vadd.f32 %v65, %v275
  %v277 = vpop.f32.mrf.mxu0
  %278 = vmatprep.mubr.f32.mxu0 0.0
  %279 = vmatmul.mubr.f32.gmra.mxu0 %v99
  %v280 = vpop.f32.mrf.mxu0
  %v281 = vadd.f32 %v65, %v280
  %v282 = vpop.f32.mrf.mxu0
  %283 = vmatprep.mubr.f32.mxu0 0.0
  %284 = vmatmul.mubr.f32.gmra.mxu0 %v102
  %v285 = vpop.f32.mrf.mxu0
  %v286 = vadd.f32 %v65, %v285
  %v287 = vpop.f32.mrf.mxu0
  %288 = vmatprep.mubr.f32.mxu0 0.0
  %289 = vmatmul.mubr.f32.gmra.mxu0 %v105
  %v290 = vpop.f32.mrf.mxu0
  %v291 = vadd.f32 %v65, %v290
  %v292 = vpop.f32.mrf.mxu0
  %293 = vmatprep.mubr.f32.mxu0 0.0
  %294 = vmatmul.mubr.f32.gmra.mxu0 %v108
  %v295 = vpop.f32.mrf.mxu0
  %v296 = vadd.f32 %v65, %v295
  %v297 = vpop.f32.mrf.mxu0
  %298 = vmatprep.mubr.f32.mxu0 0.0
  %299 = vmatmul.mubr.f32.gmra.mxu0 %v111
  %v300 = vpop.f32.mrf.mxu0
  %v301 = vadd.f32 %v65, %v300
  %v302 = vpop.f32.mrf.mxu0
  %303 = vmatprep.mubr.f32.mxu0 0.0
  %304 = vmatmul.mubr.f32.gmra.mxu0 %v114
  %v305 = vpop.f32.mrf.mxu0
  %v306 = vadd.f32 %v65, %v305
  %v307 = vpop.f32.mrf.mxu0
  %308 = vmatprep.mubr.f32.mxu0 0.0
  %309 = vmatmul.mubr.f32.gmra.mxu0 %v117
  %v310 = vpop.f32.mrf.mxu0
  %v311 = vadd.f32 %v65, %v310
  %v312 = vpop.f32.mrf.mxu0
  %313 = vmatprep.mubr.f32.mxu0 0.0
  %314 = vmatmul.mubr.f32.gmra.mxu0 %v120
  %v315 = vpop.f32.mrf.mxu0
  %v316 = vadd.f32 %v65, %v315
  %v317 = vpop.f32.mrf.mxu0
  %318 = vmatprep.mubr.f32.mxu0 0.0
  %319 = vmatmul.mubr.f32.gmra.mxu0 %v123
  %v320 = vpop.f32.mrf.mxu0
  %v321 = vadd.f32 %v65, %v320
  %v322 = vpop.f32.mrf.mxu0
  %323 = vmatprep.mubr.f32.mxu0 0.0
  %324 = vmatmul.mubr.f32.gmra.mxu0 %v126
  %v325 = vpop.f32.mrf.mxu0
  %v326 = vadd.f32 %v65, %v325
  %v327 = vpop.f32.mrf.mxu0
  %328 = vmatprep.mubr.f32.mxu0 0.0
  %329 = vmatmul.mubr.f32.gmra.mxu0 %v129
  %v330 = vpop.f32.mrf.mxu0
  %v331 = vadd.f32 %v65, %v330
  %v332 = vpop.f32.mrf.mxu0
  %333 = vmatprep.mubr.f32.mxu0 0.0
  %334 = vmatmul.mubr.f32.gmra.mxu0 %v132
  %v335 = vpop.f32.mrf.mxu0
  %v336 = vadd.f32 %v65, %v335
  %v337 = vpop.f32.mrf.mxu0
  %338 = vmatprep.mubr.f32.mxu0 0.0
  %339 = vmatmul.mubr.f32.gmra.mxu0 %v135
  %v340 = vpop.f32.mrf.mxu0
  %v341 = vadd.f32 %v65, %v340
  %v342 = vpop.f32.mrf.mxu0
  %343 = vmatprep.mubr.f32.mxu0 0.0
  %344 = vmatmul.mubr.f32.gmra.mxu0 %v138
  %v345 = vpop.f32.mrf.mxu0
  %v346 = vadd.f32 %v65, %v345
  %v347 = vpop.f32.mrf.mxu0
  %348 = vmatprep.mubr.f32.mxu0 0.0
  %349 = vmatmul.mubr.f32.gmra.mxu0 %v141
  %v350 = vpop.f32.mrf.mxu0
  %v351 = vadd.f32 %v65, %v350
  %v352 = vpop.f32.mrf.mxu0
  %353 = vmatprep.mubr.f32.mxu0 0.0
  %354 = vmatmul.mubr.f32.gmra.mxu0 %v144
  %v355 = vpop.f32.mrf.mxu0
  %v356 = vadd.f32 %v65, %v355
  %v357 = vpop.f32.mrf.mxu0
  %358 = vmatprep.mubr.f32.mxu0 0.0
  %359 = vmatmul.mubr.f32.gmra.mxu0 %v147
  %v360 = vpop.f32.mrf.mxu0
  %v361 = vadd.f32 %v65, %v360
  %v362 = vpop.f32.mrf.mxu0
  %363 = vmatprep.mubr.f32.mxu0 0.0
  %364 = vmatmul.mubr.f32.gmra.mxu0 %v150
  %v365 = vpop.f32.mrf.mxu0
  %v366 = vadd.f32 %v65, %v365
  %v367 = vpop.f32.mrf.mxu0
  %368 = vmatprep.mubr.f32.mxu0 0.0
  %369 = vmatmul.mubr.f32.gmra.mxu0 %v153
  %v370 = vpop.f32.mrf.mxu0
  %v371 = vadd.f32 %v65, %v370
  %v372 = vpop.f32.mrf.mxu0
  %373 = vmatprep.mubr.f32.mxu0 0.0
  %374 = vmatmul.mubr.f32.gmra.mxu0 %v156
  %v375 = vpop.f32.mrf.mxu0
  %v376 = vadd.f32 %v65, %v375
  %v377 = vpop.f32.mrf.mxu0
  %378 = vmatprep.mubr.f32.mxu0 0.0
  %379 = vmatmul.mubr.f32.gmra.mxu0 %v159
  %v380 = vpop.f32.mrf.mxu0
  %v381 = vadd.f32 %v65, %v380
  %v382 = vpop.f32.mrf.mxu0
  %383 = vmatprep.mubr.f32.mxu0 0.0
  %384 = vmatmul.mubr.f32.gmra.mxu0 %v162
  %v385 = vpop.f32.mrf.mxu0
  %v386 = vadd.f32 %v65, %v385
  %v387 = vpop.f32.mrf.mxu0
  %388 = vdwg.mxu0
  %v389 = vmax.f32 %v231, 0.0
  %v390 = vmax.f32 %v236, 0.0
  %v391 = vmax.f32 %v241, 0.0
  %v392 = vmax.f32 %v246, 0.0
  %v393 = vmax.f32 %v251, 0.0
  %v394 = vmax.f32 %v256, 0.0
  %v395 = vmax.f32 %v261, 0.0
  %v396 = vmax.f32 %v266, 0.0
  %v397 = vmax.f32 %v271, 0.0
  %v398 = vmax.f32 %v276, 0.0
  %v399 = vmax.f32 %v281, 0.0
  %v400 = vmax.f32 %v286, 0.0
  %v401 = vmax.f32 %v291, 0.0
  %v402 = vmax.f32 %v296, 0.0
  %v403 = vmax.f32 %v301, 0.0
  %v404 = vmax.f32 %v306, 0.0
  %v405 = vmax.f32 %v311, 0.0
  %v406 = vmax.f32 %v316, 0.0
  %v407 = vmax.f32 %v321, 0.0
  %v408 = vmax.f32 %v326, 0.0
  %v409 = vmax.f32 %v331, 0.0
  %v410 = vmax.f32 %v336, 0.0
  %v411 = vmax.f32 %v341, 0.0
  %v412 = vmax.f32 %v346, 0.0
  %v413 = vmax.f32 %v351, 0.0
  %v414 = vmax.f32 %v356, 0.0
  %v415 = vmax.f32 %v361, 0.0
  %v416 = vmax.f32 %v366, 0.0
  %v417 = vmax.f32 %v371, 0.0
  %v418 = vmax.f32 %v376, 0.0
  %v419 = vmax.f32 %v381, 0.0
  %v420 = vmax.f32 %v386, 0.0
  %v421 = vld [vmem:[%s3] sm:$0xff]
  %v422 = vld [vmem:[%s3 + $0x8] sm:$0xff]
  %v423 = vld [vmem:[%s3 + $0x10] sm:$0xff]
  %v424 = vld [vmem:[%s3 + $0x18] sm:$0xff]
  %v425 = vld [vmem:[%s4] sm:$0x1]
  %v427 = vlaneseq
  %v428 = vshrl.u32 %v427, 7
  %v429 = vsub.s32 0, %v428
  %v430 = vrot.slane %v425, %v429
  %vm432 = vcmask 261120
  %v434 = vsel %vm432, %v389, 0
  %v437 = vsel %vm432, %v390, 0
  %v440 = vsel %vm432, %v391, 0
  %v443 = vsel %vm432, %v392, 0
  %v446 = vsel %vm432, %v393, 0
  %v449 = vsel %vm432, %v394, 0
  %v452 = vsel %vm432, %v395, 0
  %v455 = vsel %vm432, %v396, 0
  %v458 = vsel %vm432, %v397, 0
  %v461 = vsel %vm432, %v398, 0
  %v464 = vsel %vm432, %v399, 0
  %v467 = vsel %vm432, %v400, 0
  %v470 = vsel %vm432, %v401, 0
  %v473 = vsel %vm432, %v402, 0
  %v476 = vsel %vm432, %v403, 0
  %v479 = vsel %vm432, %v404, 0
  %v482 = vsel %vm432, %v405, 0
  %v485 = vsel %vm432, %v406, 0
  %v488 = vsel %vm432, %v407, 0
  %v491 = vsel %vm432, %v408, 0
  %v494 = vsel %vm432, %v409, 0
  %v497 = vsel %vm432, %v410, 0
  %v500 = vsel %vm432, %v411, 0
  %v503 = vsel %vm432, %v412, 0
  %v506 = vsel %vm432, %v413, 0
  %v509 = vsel %vm432, %v414, 0
  %v512 = vsel %vm432, %v415, 0
  %v515 = vsel %vm432, %v416, 0
  %v518 = vsel %vm432, %v417, 0
  %v521 = vsel %vm432, %v418, 0
  %v524 = vsel %vm432, %v419, 0
  %v527 = vsel %vm432, %v420, 0
  %529 = vmatprep.subr.mxu0 0.0
  %530 = vmatpush1.msra.mxu0 0.0
  %531 = vmatprep.subr.mxu0 0.0
  %532 = vmatpush1.msra.mxu0 0.0
  %533 = vmatprep.subr.mxu0 0.0
  %534 = vmatpush1.msra.mxu0 0.0
  %535 = vmatprep.subr.mxu0 0.0
  %536 = vmatpush1.msra.mxu0 0.0
  %537 = vmatprep.subr.mxu0 0.0
  %538 = vmatpush1.msra.mxu0 0.0
  %539 = vmatprep.subr.mxu0 0.0
  %540 = vmatpush1.msra.mxu0 0.0
  %541 = vmatprep.subr.mxu0 0.0
  %542 = vmatpush1.msra.mxu0 0.0
  %543 = vmatprep.subr.mxu0 0.0
  %544 = vmatpush1.msra.mxu0 0.0
  %545 = vmatprep.subr.mxu0 0.0
  %546 = vmatpush1.msra.mxu0 0.0
  %547 = vmatprep.subr.mxu0 0.0
  %548 = vmatpush1.msra.mxu0 0.0
  %549 = vmatprep.subr.mxu0 0.0
  %550 = vmatpush1.msra.mxu0 0.0
  %551 = vmatprep.subr.mxu0 0.0
  %552 = vmatpush1.msra.mxu0 0.0
  %553 = vmatprep.subr.mxu0 0.0
  %554 = vmatpush1.msra.mxu0 %v424
  %555 = vmatprep.subr.mxu0 0.0
  %556 = vmatpush1.msra.mxu0 %v423
  %557 = vmatprep.subr.mxu0 0.0
  %558 = vmatpush1.msra.mxu0 %v422
  %559 = vmatprep.subr.mxu0 0.0
  %560 = vmatpush1.msra.mxu0 %v421
  %561 = vmatprep.subr.mxu0 0.0
  %562 = vmatpush2.msra.mxu0 0.0
  %563 = vmatprep.subr.mxu0 0.0
  %564 = vmatpush2.msra.mxu0 0.0
  %565 = vmatprep.subr.mxu0 0.0
  %566 = vmatpush2.msra.mxu0 0.0
  %567 = vmatprep.subr.mxu0 0.0
  %568 = vmatpush2.msra.mxu0 0.0
  %569 = vmatprep.subr.mxu0 0.0
  %570 = vmatpush2.msra.mxu0 0.0
  %571 = vmatprep.subr.mxu0 0.0
  %572 = vmatpush2.msra.mxu0 0.0
  %573 = vmatprep.subr.mxu0 0.0
  %574 = vmatpush2.msra.mxu0 0.0
  %575 = vmatprep.subr.mxu0 0.0
  %576 = vmatpush2.msra.mxu0 0.0
  %577 = vmatprep.subr.mxu0 0.0
  %578 = vmatpush2.msra.mxu0 0.0
  %579 = vmatprep.subr.mxu0 0.0
  %580 = vmatpush2.msra.mxu0 0.0
  %581 = vmatprep.subr.mxu0 0.0
  %582 = vmatpush2.msra.mxu0 0.0
  %583 = vmatprep.subr.mxu0 0.0
  %584 = vmatpush2.msra.mxu0 0.0
  %585 = vmatprep.subr.mxu0 0.0
  %586 = vmatpush2.msra.mxu0 0.0
  %587 = vmatprep.subr.mxu0 0.0
  %588 = vmatpush2.msra.mxu0 0.0
  %589 = vmatprep.subr.mxu0 0.0
  %590 = vmatpush2.msra.mxu0 0.0
  %591 = vmatprep.subr.mxu0 0.0
  %592 = vmatpush2.msra.mxu0 0.0
  %593 = vmatprep.mubr.f32.mxu0 0.0
  %594 = vmatmul.mubr.f32.gmra.mxu0 %v434
  %v595 = vpop.f32.mrf.mxu0
  %v596 = vadd.f32 %v430, %v595
  %v597 = vpop.f32.mrf.mxu0
  %598 = vmatprep.mubr.f32.mxu0 0.0
  %599 = vmatmul.mubr.f32.gmra.mxu0 %v437
  %v600 = vpop.f32.mrf.mxu0
  %v601 = vadd.f32 %v430, %v600
  %v602 = vpop.f32.mrf.mxu0
  %603 = vmatprep.mubr.f32.mxu0 0.0
  %604 = vmatmul.mubr.f32.gmra.mxu0 %v440
  %v605 = vpop.f32.mrf.mxu0
  %v606 = vadd.f32 %v430, %v605
  %v607 = vpop.f32.mrf.mxu0
  %608 = vmatprep.mubr.f32.mxu0 0.0
  %609 = vmatmul.mubr.f32.gmra.mxu0 %v443
  %v610 = vpop.f32.mrf.mxu0
  %v611 = vadd.f32 %v430, %v610
  %v612 = vpop.f32.mrf.mxu0
  %613 = vmatprep.mubr.f32.mxu0 0.0
  %614 = vmatmul.mubr.f32.gmra.mxu0 %v446
  %v615 = vpop.f32.mrf.mxu0
  %v616 = vadd.f32 %v430, %v615
  %v617 = vpop.f32.mrf.mxu0
  %618 = vmatprep.mubr.f32.mxu0 0.0
  %619 = vmatmul.mubr.f32.gmra.mxu0 %v449
  %v620 = vpop.f32.mrf.mxu0
  %v621 = vadd.f32 %v430, %v620
  %v622 = vpop.f32.mrf.mxu0
  %623 = vmatprep.mubr.f32.mxu0 0.0
  %624 = vmatmul.mubr.f32.gmra.mxu0 %v452
  %v625 = vpop.f32.mrf.mxu0
  %v626 = vadd.f32 %v430, %v625
  %v627 = vpop.f32.mrf.mxu0
  %628 = vmatprep.mubr.f32.mxu0 0.0
  %629 = vmatmul.mubr.f32.gmra.mxu0 %v455
  %v630 = vpop.f32.mrf.mxu0
  %v631 = vadd.f32 %v430, %v630
  %v632 = vpop.f32.mrf.mxu0
  %633 = vmatprep.mubr.f32.mxu0 0.0
  %634 = vmatmul.mubr.f32.gmra.mxu0 %v458
  %v635 = vpop.f32.mrf.mxu0
  %v636 = vadd.f32 %v430, %v635
  %v637 = vpop.f32.mrf.mxu0
  %638 = vmatprep.mubr.f32.mxu0 0.0
  %639 = vmatmul.mubr.f32.gmra.mxu0 %v461
  %v640 = vpop.f32.mrf.mxu0
  %v641 = vadd.f32 %v430, %v640
  %v642 = vpop.f32.mrf.mxu0
  %643 = vmatprep.mubr.f32.mxu0 0.0
  %644 = vmatmul.mubr.f32.gmra.mxu0 %v464
  %v645 = vpop.f32.mrf.mxu0
  %v646 = vadd.f32 %v430, %v645
  %v647 = vpop.f32.mrf.mxu0
  %648 = vmatprep.mubr.f32.mxu0 0.0
  %649 = vmatmul.mubr.f32.gmra.mxu0 %v467
  %v650 = vpop.f32.mrf.mxu0
  %v651 = vadd.f32 %v430, %v650
  %v652 = vpop.f32.mrf.mxu0
  %653 = vmatprep.mubr.f32.mxu0 0.0
  %654 = vmatmul.mubr.f32.gmra.mxu0 %v470
  %v655 = vpop.f32.mrf.mxu0
  %v656 = vadd.f32 %v430, %v655
  %v657 = vpop.f32.mrf.mxu0
  %658 = vmatprep.mubr.f32.mxu0 0.0
  %659 = vmatmul.mubr.f32.gmra.mxu0 %v473
  %v660 = vpop.f32.mrf.mxu0
  %v661 = vadd.f32 %v430, %v660
  %v662 = vpop.f32.mrf.mxu0
  %663 = vmatprep.mubr.f32.mxu0 0.0
  %664 = vmatmul.mubr.f32.gmra.mxu0 %v476
  %v665 = vpop.f32.mrf.mxu0
  %v666 = vadd.f32 %v430, %v665
  %v667 = vpop.f32.mrf.mxu0
  %668 = vmatprep.mubr.f32.mxu0 0.0
  %669 = vmatmul.mubr.f32.gmra.mxu0 %v479
  %v670 = vpop.f32.mrf.mxu0
  %v671 = vadd.f32 %v430, %v670
  %v672 = vpop.f32.mrf.mxu0
  %673 = vmatprep.mubr.f32.mxu0 0.0
  %674 = vmatmul.mubr.f32.gmra.mxu0 %v482
  %v675 = vpop.f32.mrf.mxu0
  %v676 = vadd.f32 %v430, %v675
  %v677 = vpop.f32.mrf.mxu0
  %678 = vmatprep.mubr.f32.mxu0 0.0
  %679 = vmatmul.mubr.f32.gmra.mxu0 %v485
  %v680 = vpop.f32.mrf.mxu0
  %v681 = vadd.f32 %v430, %v680
  %v682 = vpop.f32.mrf.mxu0
  %683 = vmatprep.mubr.f32.mxu0 0.0
  %684 = vmatmul.mubr.f32.gmra.mxu0 %v488
  %v685 = vpop.f32.mrf.mxu0
  %v686 = vadd.f32 %v430, %v685
  %v687 = vpop.f32.mrf.mxu0
  %688 = vmatprep.mubr.f32.mxu0 0.0
  %689 = vmatmul.mubr.f32.gmra.mxu0 %v491
  %v690 = vpop.f32.mrf.mxu0
  %v691 = vadd.f32 %v430, %v690
  %v692 = vpop.f32.mrf.mxu0
  %693 = vmatprep.mubr.f32.mxu0 0.0
  %694 = vmatmul.mubr.f32.gmra.mxu0 %v494
  %v695 = vpop.f32.mrf.mxu0
  %v696 = vadd.f32 %v430, %v695
  %v697 = vpop.f32.mrf.mxu0
  %698 = vmatprep.mubr.f32.mxu0 0.0
  %699 = vmatmul.mubr.f32.gmra.mxu0 %v497
  %v700 = vpop.f32.mrf.mxu0
  %v701 = vadd.f32 %v430, %v700
  %v702 = vpop.f32.mrf.mxu0
  %703 = vmatprep.mubr.f32.mxu0 0.0
  %704 = vmatmul.mubr.f32.gmra.mxu0 %v500
  %v705 = vpop.f32.mrf.mxu0
  %v706 = vadd.f32 %v430, %v705
  %v707 = vpop.f32.mrf.mxu0
  %708 = vmatprep.mubr.f32.mxu0 0.0
  %709 = vmatmul.mubr.f32.gmra.mxu0 %v503
  %v710 = vpop.f32.mrf.mxu0
  %v711 = vadd.f32 %v430, %v710
  %v712 = vpop.f32.mrf.mxu0
  %713 = vmatprep.mubr.f32.mxu0 0.0
  %714 = vmatmul.mubr.f32.gmra.mxu0 %v506
  %v715 = vpop.f32.mrf.mxu0
  %v716 = vadd.f32 %v430, %v715
  %v717 = vpop.f32.mrf.mxu0
  %718 = vmatprep.mubr.f32.mxu0 0.0
  %719 = vmatmul.mubr.f32.gmra.mxu0 %v509
  %v720 = vpop.f32.mrf.mxu0
  %v721 = vadd.f32 %v430, %v720
  %v722 = vpop.f32.mrf.mxu0
  %723 = vmatprep.mubr.f32.mxu0 0.0
  %724 = vmatmul.mubr.f32.gmra.mxu0 %v512
  %v725 = vpop.f32.mrf.mxu0
  %v726 = vadd.f32 %v430, %v725
  %v727 = vpop.f32.mrf.mxu0
  %728 = vmatprep.mubr.f32.mxu0 0.0
  %729 = vmatmul.mubr.f32.gmra.mxu0 %v515
  %v730 = vpop.f32.mrf.mxu0
  %v731 = vadd.f32 %v430, %v730
  %v732 = vpop.f32.mrf.mxu0
  %733 = vmatprep.mubr.f32.mxu0 0.0
  %734 = vmatmul.mubr.f32.gmra.mxu0 %v518
  %v735 = vpop.f32.mrf.mxu0
  %v736 = vadd.f32 %v430, %v735
  %v737 = vpop.f32.mrf.mxu0
  %738 = vmatprep.mubr.f32.mxu0 0.0
  %739 = vmatmul.mubr.f32.gmra.mxu0 %v521
  %v740 = vpop.f32.mrf.mxu0
  %v741 = vadd.f32 %v430, %v740
  %v742 = vpop.f32.mrf.mxu0
  %743 = vmatprep.mubr.f32.mxu0 0.0
  %744 = vmatmul.mubr.f32.gmra.mxu0 %v524
  %v745 = vpop.f32.mrf.mxu0
  %v746 = vadd.f32 %v430, %v745
  %v747 = vpop.f32.mrf.mxu0
  %748 = vmatprep.mubr.f32.mxu0 0.0
  %749 = vmatmul.mubr.f32.gmra.mxu0 %v527
  %v750 = vpop.f32.mrf.mxu0
  %v751 = vadd.f32 %v430, %v750
  %v752 = vpop.f32.mrf.mxu0
  %753 = vdwg.mxu0
  %v754 = vmax.f32 %v596, 0.0
  %v755 = vmax.f32 %v601, 0.0
  %v756 = vmax.f32 %v606, 0.0
  %v757 = vmax.f32 %v611, 0.0
  %v758 = vmax.f32 %v616, 0.0
  %v759 = vmax.f32 %v621, 0.0
  %v760 = vmax.f32 %v626, 0.0
  %v761 = vmax.f32 %v631, 0.0
  %v762 = vmax.f32 %v636, 0.0
  %v763 = vmax.f32 %v641, 0.0
  %v764 = vmax.f32 %v646, 0.0
  %v765 = vmax.f32 %v651, 0.0
  %v766 = vmax.f32 %v656, 0.0
  %v767 = vmax.f32 %v661, 0.0
  %v768 = vmax.f32 %v666, 0.0
  %v769 = vmax.f32 %v671, 0.0
  %v770 = vmax.f32 %v676, 0.0
  %v771 = vmax.f32 %v681, 0.0
  %v772 = vmax.f32 %v686, 0.0
  %v773 = vmax.f32 %v691, 0.0
  %v774 = vmax.f32 %v696, 0.0
  %v775 = vmax.f32 %v701, 0.0
  %v776 = vmax.f32 %v706, 0.0
  %v777 = vmax.f32 %v711, 0.0
  %v778 = vmax.f32 %v716, 0.0
  %v779 = vmax.f32 %v721, 0.0
  %v780 = vmax.f32 %v726, 0.0
  %v781 = vmax.f32 %v731, 0.0
  %v782 = vmax.f32 %v736, 0.0
  %v783 = vmax.f32 %v741, 0.0
  %v784 = vmax.f32 %v746, 0.0
  %v785 = vmax.f32 %v751, 0.0
  %v786 = vld [vmem:[%s5] sm:$0xff]
  %v787 = vld [vmem:[%s5 + $0x8] sm:$0xff]
  %v788 = vld [vmem:[%s5 + $0x10] sm:$0xff]
  %v789 = vld [vmem:[%s5 + $0x18] sm:$0xff]
  %v790 = vld [vmem:[%s5 + $0x20] sm:$0xff]
  %v791 = vld [vmem:[%s5 + $0x28] sm:$0xff]
  %v792 = vld [vmem:[%s5 + $0x30] sm:$0xff]
  %v793 = vld [vmem:[%s5 + $0x38] sm:$0xff]
  %v794 = vld [vmem:[%s6] sm:$0x1]
  %v796 = vlaneseq
  %v797 = vshrl.u32 %v796, 7
  %v798 = vsub.s32 0, %v797
  %v799 = vrot.slane %v794, %v798
  %vm801 = vcmask 523264
  %v803 = vsel %vm801, %v754, 0
  %v806 = vsel %vm801, %v755, 0
  %v809 = vsel %vm801, %v756, 0
  %v812 = vsel %vm801, %v757, 0
  %v815 = vsel %vm801, %v758, 0
  %v818 = vsel %vm801, %v759, 0
  %v821 = vsel %vm801, %v760, 0
  %v824 = vsel %vm801, %v761, 0
  %v827 = vsel %vm801, %v762, 0
  %v830 = vsel %vm801, %v763, 0
  %v833 = vsel %vm801, %v764, 0
  %v836 = vsel %vm801, %v765, 0
  %v839 = vsel %vm801, %v766, 0
  %v842 = vsel %vm801, %v767, 0
  %v845 = vsel %vm801, %v768, 0
  %v848 = vsel %vm801, %v769, 0
  %v851 = vsel %vm801, %v770, 0
  %v854 = vsel %vm801, %v771, 0
  %v857 = vsel %vm801, %v772, 0
  %v860 = vsel %vm801, %v773, 0
  %v863 = vsel %vm801, %v774, 0
  %v866 = vsel %vm801, %v775, 0
  %v869 = vsel %vm801, %v776, 0
  %v872 = vsel %vm801, %v777, 0
  %v875 = vsel %vm801, %v778, 0
  %v878 = vsel %vm801, %v779, 0
  %v881 = vsel %vm801, %v780, 0
  %v884 = vsel %vm801, %v781, 0
  %v887 = vsel %vm801, %v782, 0
  %v890 = vsel %vm801, %v783, 0
  %v893 = vsel %vm801, %v784, 0
  %v896 = vsel %vm801, %v785, 0
  %898 = vmatprep.subr.mxu0 0.0
  %899 = vmatpush1.msra.mxu0 0.0
  %900 = vmatprep.subr.mxu0 0.0
  %901 = vmatpush1.msra.mxu0 0.0
  %902 = vmatprep.subr.mxu0 0.0
  %903 = vmatpush1.msra.mxu0 0.0
  %904 = vmatprep.subr.mxu0 0.0
  %905 = vmatpush1.msra.mxu0 0.0
  %906 = vmatprep.subr.mxu0 0.0
  %907 = vmatpush1.msra.mxu0 0.0
  %908 = vmatprep.subr.mxu0 0.0
  %909 = vmatpush1.msra.mxu0 0.0
  %910 = vmatprep.subr.mxu0 0.0
  %911 = vmatpush1.msra.mxu0 0.0
  %912 = vmatprep.subr.mxu0 0.0
  %913 = vmatpush1.msra.mxu0 0.0
  %914 = vmatprep.subr.mxu0 0.0
  %915 = vmatpush1.msra.mxu0 %v793
  %916 = vmatprep.subr.mxu0 0.0
  %917 = vmatpush1.msra.mxu0 %v792
  %918 = vmatprep.subr.mxu0 0.0
  %919 = vmatpush1.msra.mxu0 %v791
  %920 = vmatprep.subr.mxu0 0.0
  %921 = vmatpush1.msra.mxu0 %v790
  %922 = vmatprep.subr.mxu0 0.0
  %923 = vmatpush1.msra.mxu0 %v789
  %924 = vmatprep.subr.mxu0 0.0
  %925 = vmatpush1.msra.mxu0 %v788
  %926 = vmatprep.subr.mxu0 0.0
  %927 = vmatpush1.msra.mxu0 %v787
  %928 = vmatprep.subr.mxu0 0.0
  %929 = vmatpush1.msra.mxu0 %v786
  %930 = vmatprep.subr.mxu0 0.0
  %931 = vmatpush2.msra.mxu0 0.0
  %932 = vmatprep.subr.mxu0 0.0
  %933 = vmatpush2.msra.mxu0 0.0
  %934 = vmatprep.subr.mxu0 0.0
  %935 = vmatpush2.msra.mxu0 0.0
  %936 = vmatprep.subr.mxu0 0.0
  %937 = vmatpush2.msra.mxu0 0.0
  %938 = vmatprep.subr.mxu0 0.0
  %939 = vmatpush2.msra.mxu0 0.0
  %940 = vmatprep.subr.mxu0 0.0
  %941 = vmatpush2.msra.mxu0 0.0
  %942 = vmatprep.subr.mxu0 0.0
  %943 = vmatpush2.msra.mxu0 0.0
  %944 = vmatprep.subr.mxu0 0.0
  %945 = vmatpush2.msra.mxu0 0.0
  %946 = vmatprep.subr.mxu0 0.0
  %947 = vmatpush2.msra.mxu0 0.0
  %948 = vmatprep.subr.mxu0 0.0
  %949 = vmatpush2.msra.mxu0 0.0
  %950 = vmatprep.subr.mxu0 0.0
  %951 = vmatpush2.msra.mxu0 0.0
  %952 = vmatprep.subr.mxu0 0.0
  %953 = vmatpush2.msra.mxu0 0.0
  %954 = vmatprep.subr.mxu0 0.0
  %955 = vmatpush2.msra.mxu0 0.0
  %956 = vmatprep.subr.mxu0 0.0
  %957 = vmatpush2.msra.mxu0 0.0
  %958 = vmatprep.subr.mxu0 0.0
  %959 = vmatpush2.msra.mxu0 0.0
  %960 = vmatprep.subr.mxu0 0.0
  %961 = vmatpush2.msra.mxu0 0.0
  %962 = vmatprep.mubr.f32.mxu0 0.0
  %963 = vmatmul.mubr.f32.gmra.mxu0 %v803
  %v964 = vpop.f32.mrf.mxu0
  %v965 = vadd.f32 %v799, %v964
  %v966 = vpop.f32.mrf.mxu0
  %967 = vmatprep.mubr.f32.mxu0 0.0
  %968 = vmatmul.mubr.f32.gmra.mxu0 %v806
  %v969 = vpop.f32.mrf.mxu0
  %v970 = vadd.f32 %v799, %v969
  %v971 = vpop.f32.mrf.mxu0
  %972 = vmatprep.mubr.f32.mxu0 0.0
  %973 = vmatmul.mubr.f32.gmra.mxu0 %v809
  %v974 = vpop.f32.mrf.mxu0
  %v975 = vadd.f32 %v799, %v974
  %v976 = vpop.f32.mrf.mxu0
  %977 = vmatprep.mubr.f32.mxu0 0.0
  %978 = vmatmul.mubr.f32.gmra.mxu0 %v812
  %v979 = vpop.f32.mrf.mxu0
  %v980 = vadd.f32 %v799, %v979
  %v981 = vpop.f32.mrf.mxu0
  %982 = vmatprep.mubr.f32.mxu0 0.0
  %983 = vmatmul.mubr.f32.gmra.mxu0 %v815
  %v984 = vpop.f32.mrf.mxu0
  %v985 = vadd.f32 %v799, %v984
  %v986 = vpop.f32.mrf.mxu0
  %987 = vmatprep.mubr.f32.mxu0 0.0
  %988 = vmatmul.mubr.f32.gmra.mxu0 %v818
  %v989 = vpop.f32.mrf.mxu0
  %v990 = vadd.f32 %v799, %v989
  %v991 = vpop.f32.mrf.mxu0
  %992 = vmatprep.mubr.f32.mxu0 0.0
  %993 = vmatmul.mubr.f32.gmra.mxu0 %v821
  %v994 = vpop.f32.mrf.mxu0
  %v995 = vadd.f32 %v799, %v994
  %v996 = vpop.f32.mrf.mxu0
  %997 = vmatprep.mubr.f32.mxu0 0.0
  %998 = vmatmul.mubr.f32.gmra.mxu0 %v824
  %v999 = vpop.f32.mrf.mxu0
  %v1000 = vadd.f32 %v799, %v999
  %v1001 = vpop.f32.mrf.mxu0
  %1002 = vmatprep.mubr.f32.mxu0 0.0
  %1003 = vmatmul.mubr.f32.gmra.mxu0 %v827
  %v1004 = vpop.f32.mrf.mxu0
  %v1005 = vadd.f32 %v799, %v1004
  %v1006 = vpop.f32.mrf.mxu0
  %1007 = vmatprep.mubr.f32.mxu0 0.0
  %1008 = vmatmul.mubr.f32.gmra.mxu0 %v830
  %v1009 = vpop.f32.mrf.mxu0
  %v1010 = vadd.f32 %v799, %v1009
  %v1011 = vpop.f32.mrf.mxu0
  %1012 = vmatprep.mubr.f32.mxu0 0.0
  %1013 = vmatmul.mubr.f32.gmra.mxu0 %v833
  %v1014 = vpop.f32.mrf.mxu0
  %v1015 = vadd.f32 %v799, %v1014
  %v1016 = vpop.f32.mrf.mxu0
  %1017 = vmatprep.mubr.f32.mxu0 0.0
  %1018 = vmatmul.mubr.f32.gmra.mxu0 %v836
  %v1019 = vpop.f32.mrf.mxu0
  %v1020 = vadd.f32 %v799, %v1019
  %v1021 = vpop.f32.mrf.mxu0
  %1022 = vmatprep.mubr.f32.mxu0 0.0
  %1023 = vmatmul.mubr.f32.gmra.mxu0 %v839
  %v1024 = vpop.f32.mrf.mxu0
  %v1025 = vadd.f32 %v799, %v1024
  %v1026 = vpop.f32.mrf.mxu0
  %1027 = vmatprep.mubr.f32.mxu0 0.0
  %1028 = vmatmul.mubr.f32.gmra.mxu0 %v842
  %v1029 = vpop.f32.mrf.mxu0
  %v1030 = vadd.f32 %v799, %v1029
  %v1031 = vpop.f32.mrf.mxu0
  %1032 = vmatprep.mubr.f32.mxu0 0.0
  %1033 = vmatmul.mubr.f32.gmra.mxu0 %v845
  %v1034 = vpop.f32.mrf.mxu0
  %v1035 = vadd.f32 %v799, %v1034
  %v1036 = vpop.f32.mrf.mxu0
  %1037 = vmatprep.mubr.f32.mxu0 0.0
  %1038 = vmatmul.mubr.f32.gmra.mxu0 %v848
  %v1039 = vpop.f32.mrf.mxu0
  %v1040 = vadd.f32 %v799, %v1039
  %v1041 = vpop.f32.mrf.mxu0
  %1042 = vmatprep.mubr.f32.mxu0 0.0
  %1043 = vmatmul.mubr.f32.gmra.mxu0 %v851
  %v1044 = vpop.f32.mrf.mxu0
  %v1045 = vadd.f32 %v799, %v1044
  %v1046 = vpop.f32.mrf.mxu0
  %1047 = vmatprep.mubr.f32.mxu0 0.0
  %1048 = vmatmul.mubr.f32.gmra.mxu0 %v854
  %v1049 = vpop.f32.mrf.mxu0
  %v1050 = vadd.f32 %v799, %v1049
  %v1051 = vpop.f32.mrf.mxu0
  %1052 = vmatprep.mubr.f32.mxu0 0.0
  %1053 = vmatmul.mubr.f32.gmra.mxu0 %v857
  %v1054 = vpop.f32.mrf.mxu0
  %v1055 = vadd.f32 %v799, %v1054
  %v1056 = vpop.f32.mrf.mxu0
  %1057 = vmatprep.mubr.f32.mxu0 0.0
  %1058 = vmatmul.mubr.f32.gmra.mxu0 %v860
  %v1059 = vpop.f32.mrf.mxu0
  %v1060 = vadd.f32 %v799, %v1059
  %v1061 = vpop.f32.mrf.mxu0
  %1062 = vmatprep.mubr.f32.mxu0 0.0
  %1063 = vmatmul.mubr.f32.gmra.mxu0 %v863
  %v1064 = vpop.f32.mrf.mxu0
  %v1065 = vadd.f32 %v799, %v1064
  %v1066 = vpop.f32.mrf.mxu0
  %1067 = vmatprep.mubr.f32.mxu0 0.0
  %1068 = vmatmul.mubr.f32.gmra.mxu0 %v866
  %v1069 = vpop.f32.mrf.mxu0
  %v1070 = vadd.f32 %v799, %v1069
  %v1071 = vpop.f32.mrf.mxu0
  %1072 = vmatprep.mubr.f32.mxu0 0.0
  %1073 = vmatmul.mubr.f32.gmra.mxu0 %v869
  %v1074 = vpop.f32.mrf.mxu0
  %v1075 = vadd.f32 %v799, %v1074
  %v1076 = vpop.f32.mrf.mxu0
  %1077 = vmatprep.mubr.f32.mxu0 0.0
  %1078 = vmatmul.mubr.f32.gmra.mxu0 %v872
  %v1079 = vpop.f32.mrf.mxu0
  %v1080 = vadd.f32 %v799, %v1079
  %v1081 = vpop.f32.mrf.mxu0
  %1082 = vmatprep.mubr.f32.mxu0 0.0
  %1083 = vmatmul.mubr.f32.gmra.mxu0 %v875
  %v1084 = vpop.f32.mrf.mxu0
  %v1085 = vadd.f32 %v799, %v1084
  %v1086 = vpop.f32.mrf.mxu0
  %1087 = vmatprep.mubr.f32.mxu0 0.0
  %1088 = vmatmul.mubr.f32.gmra.mxu0 %v878
  %v1089 = vpop.f32.mrf.mxu0
  %v1090 = vadd.f32 %v799, %v1089
  %v1091 = vpop.f32.mrf.mxu0
  %1092 = vmatprep.mubr.f32.mxu0 0.0
  %1093 = vmatmul.mubr.f32.gmra.mxu0 %v881
  %v1094 = vpop.f32.mrf.mxu0
  %v1095 = vadd.f32 %v799, %v1094
  %v1096 = vpop.f32.mrf.mxu0
  %1097 = vmatprep.mubr.f32.mxu0 0.0
  %1098 = vmatmul.mubr.f32.gmra.mxu0 %v884
  %v1099 = vpop.f32.mrf.mxu0
  %v1100 = vadd.f32 %v799, %v1099
  %v1101 = vpop.f32.mrf.mxu0
  %1102 = vmatprep.mubr.f32.mxu0 0.0
  %1103 = vmatmul.mubr.f32.gmra.mxu0 %v887
  %v1104 = vpop.f32.mrf.mxu0
  %v1105 = vadd.f32 %v799, %v1104
  %v1106 = vpop.f32.mrf.mxu0
  %1107 = vmatprep.mubr.f32.mxu0 0.0
  %1108 = vmatmul.mubr.f32.gmra.mxu0 %v890
  %v1109 = vpop.f32.mrf.mxu0
  %v1110 = vadd.f32 %v799, %v1109
  %v1111 = vpop.f32.mrf.mxu0
  %1112 = vmatprep.mubr.f32.mxu0 0.0
  %1113 = vmatmul.mubr.f32.gmra.mxu0 %v893
  %v1114 = vpop.f32.mrf.mxu0
  %v1115 = vadd.f32 %v799, %v1114
  %v1116 = vpop.f32.mrf.mxu0
  %1117 = vmatprep.mubr.f32.mxu0 0.0
  %1118 = vmatmul.mubr.f32.gmra.mxu0 %v896
  %v1119 = vpop.f32.mrf.mxu0
  %v1120 = vadd.f32 %v799, %v1119
  %v1121 = vpop.f32.mrf.mxu0
  %1122 = vdwg.mxu0
  %vm1123 = vcmask 64512
  %1124 = vst.msk [vmem:[%s7] sm:$0xff] %vm1123, %v965
  %1125 = vst.msk [vmem:[%s7 + $0x8] sm:$0xff] %vm1123, %v970
  %1126 = vst.msk [vmem:[%s7 + $0x10] sm:$0xff] %vm1123, %v975
  %1127 = vst.msk [vmem:[%s7 + $0x18] sm:$0xff] %vm1123, %v980
  %1128 = vst.msk [vmem:[%s7 + $0x20] sm:$0xff] %vm1123, %v985
  %1129 = vst.msk [vmem:[%s7 + $0x28] sm:$0xff] %vm1123, %v990
  %1130 = vst.msk [vmem:[%s7 + $0x30] sm:$0xff] %vm1123, %v995
  %1131 = vst.msk [vmem:[%s7 + $0x38] sm:$0xff] %vm1123, %v1000
  %1132 = vst.msk [vmem:[%s7 + $0x40] sm:$0xff] %vm1123, %v1005
  %1133 = vst.msk [vmem:[%s7 + $0x48] sm:$0xff] %vm1123, %v1010
  %1134 = vst.msk [vmem:[%s7 + $0x50] sm:$0xff] %vm1123, %v1015
  %1135 = vst.msk [vmem:[%s7 + $0x58] sm:$0xff] %vm1123, %v1020
  %1136 = vst.msk [vmem:[%s7 + $0x60] sm:$0xff] %vm1123, %v1025
  %1137 = vst.msk [vmem:[%s7 + $0x68] sm:$0xff] %vm1123, %v1030
  %1138 = vst.msk [vmem:[%s7 + $0x70] sm:$0xff] %vm1123, %v1035
  %1139 = vst.msk [vmem:[%s7 + $0x78] sm:$0xff] %vm1123, %v1040
  %1140 = vst.msk [vmem:[%s7 + $0x80] sm:$0xff] %vm1123, %v1045
  %1141 = vst.msk [vmem:[%s7 + $0x88] sm:$0xff] %vm1123, %v1050
  %1142 = vst.msk [vmem:[%s7 + $0x90] sm:$0xff] %vm1123, %v1055
  %1143 = vst.msk [vmem:[%s7 + $0x98] sm:$0xff] %vm1123, %v1060
  %1144 = vst.msk [vmem:[%s7 + $0xa0] sm:$0xff] %vm1123, %v1065
  %1145 = vst.msk [vmem:[%s7 + $0xa8] sm:$0xff] %vm1123, %v1070
  %1146 = vst.msk [vmem:[%s7 + $0xb0] sm:$0xff] %vm1123, %v1075
  %1147 = vst.msk [vmem:[%s7 + $0xb8] sm:$0xff] %vm1123, %v1080
  %1148 = vst.msk [vmem:[%s7 + $0xc0] sm:$0xff] %vm1123, %v1085
  %1149 = vst.msk [vmem:[%s7 + $0xc8] sm:$0xff] %vm1123, %v1090
  %1150 = vst.msk [vmem:[%s7 + $0xd0] sm:$0xff] %vm1123, %v1095
  %1151 = vst.msk [vmem:[%s7 + $0xd8] sm:$0xff] %vm1123, %v1100
  %1152 = vst.msk [vmem:[%s7 + $0xe0] sm:$0xff] %vm1123, %v1105
  %1153 = vst.msk [vmem:[%s7 + $0xe8] sm:$0xff] %vm1123, %v1110
  %1154 = vst.msk [vmem:[%s7 + $0xf0] sm:$0xff] %vm1123, %v1115
  %1155 = vst.msk [vmem:[%s7 + $0xf8] sm:$0xff] %vm1123, %v1120
  // Predicated region
  $region30: #{tpu_custom_call.1} parent=0 // pred_check
    _
  $region31: #{tpu_custom_call.1} parent=0 // pred_check_branch
    %1157 = sbr.rel (0) target = $region33
  $region32: #{tpu_custom_call.1} parent=0 // pred_region
    _
  $region33: #{tpu_custom_call.1} parent=0 // pred_fallthru
    _
  // Predicated region
  $region34: #{tpu_custom_call.1} parent=0 // pred_check
    _
  $region35: #{tpu_custom_call.1} parent=0 // pred_check_branch
    %1159 = sbr.rel (0) target = $region37
  $region36: #{tpu_custom_call.1} parent=0 // pred_region
    _
  $region37: #{tpu_custom_call.1} parent=0 // pred_fallthru
    _

</llo_original>
